<compile_context>
chip_gen: v7x
topology: tpu7x:2x2x1
jax: 0.10.0
libtpu: 0.0.40
codegen_flags: <defaults>
</compile_context>

<pallas_src>
import functools

import jax
import jax.numpy as jnp
from jax.experimental import pallas as pl
from jax.experimental.pallas import tpu as pltpu

_MIB = 1024 * 1024


def _round_up(x: int, m: int) -> int:
    return ((x + m - 1) // m) * m


def _vmem_limit(bytes_needed: int) -> int:
    """Explicit accounting + headroom, clamped for cross-generation safety."""
    return int(min(100 * _MIB, max(32 * _MIB, 2 * bytes_needed)))


# --------------------------------------------------------------------------- #
# Kernel 1: fused hidden (tanh) stack.  refs = (x, w0, b0, ..., h_out)
# --------------------------------------------------------------------------- #
def _hidden_stack_kernel(*refs, n_hidden: int):
    x_ref = refs[0]
    w_refs = [refs[1 + 2 * i] for i in range(n_hidden)]
    b_refs = [refs[2 + 2 * i] for i in range(n_hidden)]
    h_ref = refs[1 + 2 * n_hidden]

    h = x_ref[...]
    for i in range(n_hidden):
        acc = jnp.dot(h, w_refs[i][...], preferred_element_type=jnp.float32)
        h = jnp.tanh(acc + b_refs[i][...]).astype(jnp.bfloat16)
    h_ref[...] = h


# --------------------------------------------------------------------------- #
# Kernel 2: last layer (no tanh), lane-dense N tiles, f32 accumulate.
# --------------------------------------------------------------------------- #
def _last_layer_kernel(h_ref, w_ref, b_ref, o_ref):
    y = jnp.dot(h_ref[...], w_ref[...], preferred_element_type=jnp.float32)
    o_ref[...] = (y + b_ref[...]).astype(o_ref.dtype)


def decoder_forward(x, params, *, tm: int = 512, tn: int = 1024,
                    out_dtype=jnp.bfloat16):
    """Run the full decoder stack as two fused Pallas kernels.

    x: (M, p_dims[0]) float32.
    params: list of (w, b) with w: (in, out) float32, b: (1, out) float32.
    tm: batch tile (multiple of 8); tn: last-layer output tile (multiple of 128).
    """
    assert tm % 8 == 0 and tn % 128 == 0
    n_layers = len(params)
    assert n_layers >= 1
    M, D0 = x.shape
    dims = [D0] + [w.shape[1] for (w, _) in params]
    d_hidden = dims[-2]          # input feature dim of the last layer
    n_last = dims[-1]

    # bf16 weights/activations (MXU-native, halves HBM traffic); f32 biases.
    x_bf = x.astype(jnp.bfloat16)
    ws = [w.astype(jnp.bfloat16) for w, _ in params]
    bs = [b.astype(jnp.float32).reshape(1, -1) for _, b in params]

    # --- tile sizes & padding ----------------------------------------------
    TM = min(tm, _round_up(M, 8))
    Mp = _round_up(M, TM)
    TN = min(tn, _round_up(n_last, 128))
    Np = _round_up(n_last, TN)

    if Mp != M:
        x_bf = jnp.pad(x_bf, ((0, Mp - M), (0, 0)))
    w_last, b_last = ws[-1], bs[-1]
    if Np != n_last:
        w_last = jnp.pad(w_last, ((0, 0), (0, Np - n_last)))
        b_last = jnp.pad(b_last, ((0, 0), (0, Np - n_last)))

    out_bytes = jnp.dtype(out_dtype).itemsize

    # --- kernel 1: hidden stack (skipped if there are no hidden layers) -----
    if n_layers >= 2:
        TM1 = TM
        # Give the v7x megacore >=2 batch tiles to shard when possible.
        if Mp // TM == 1 and TM % 16 == 0 and TM > 8:
            TM1 = TM // 2
        grid1 = (Mp // TM1,)

        in_specs1 = [pl.BlockSpec((TM1, dims[0]), lambda i: (i, 0))]
        operands1 = [x_bf]
        for li in range(n_layers - 1):
            # Hidden weights/biases are small: keep them fully VMEM-resident
            # (constant index => fetched once at pipeline start).
            in_specs1.append(
                pl.BlockSpec((dims[li], dims[li + 1]), lambda i: (0, 0)))
            in_specs1.append(pl.BlockSpec((1, dims[li + 1]), lambda i: (0, 0)))
            operands1.extend((ws[li], bs[li]))

        flops1 = 2 * Mp * sum(dims[li] * dims[li + 1]
                              for li in range(n_layers - 1))
        trans1 = Mp * sum(dims[li + 1] for li in range(n_layers - 1))
        bytes1 = (Mp * dims[0] * 2
                  + sum(dims[li] * dims[li + 1] * 2 + dims[li + 1] * 4
                        for li in range(n_layers - 1))
                  + Mp * d_hidden * 2)
        vmem1 = (2 * TM1 * dims[0] * 2
                 + sum(2 * (dims[li] * dims[li + 1] * 2 + 8 * dims[li + 1] * 4)
                       for li in range(n_layers - 1))
                 + 2 * TM1 * d_hidden * 2)

        h_bf = pl.pallas_call(
            functools.partial(_hidden_stack_kernel, n_hidden=n_layers - 1),
            out_shape=jax.ShapeDtypeStruct((Mp, d_hidden), jnp.bfloat16),
            grid=grid1,
            in_specs=in_specs1,
            out_specs=pl.BlockSpec((TM1, d_hidden), lambda i: (i, 0)),
            compiler_params=pltpu.CompilerParams(
                dimension_semantics=("parallel",),
                vmem_limit_bytes=_vmem_limit(vmem1),
            ),
            cost_estimate=pl.CostEstimate(
                flops=flops1, transcendentals=trans1, bytes_accessed=bytes1),
        )(*operands1)
    else:
        h_bf = x_bf  # single-layer decoder: last layer reads X directly

    # --- kernel 2: last layer, N-outer / batch-inner grid --------------------
    # Weight block index is constant across the inner batch axis, so each
    # (d_hidden, TN) tile of the big weight is DMA'd from HBM exactly once.
    grid2 = (Np // TN, Mp // TM)

    flops2 = 2 * Mp * d_hidden * Np
    bytes2 = ((Np // TN) * Mp * d_hidden * 2      # H re-streamed per N tile
              + d_hidden * Np * 2 + Np * 4        # W_last + bias, fetched once
              + Mp * Np * out_bytes)              # output writeback
    vmem2 = (2 * TM * d_hidden * 2 + 2 * d_hidden * TN * 2
             + 2 * 8 * TN * 4 + 2 * TM * TN * out_bytes)

    out = pl.pallas_call(
        _last_layer_kernel,
        out_shape=jax.ShapeDtypeStruct((Mp, Np), out_dtype),
        grid=grid2,
        in_specs=[
            pl.BlockSpec((TM, d_hidden), lambda j, i: (i, 0)),
            pl.BlockSpec((d_hidden, TN), lambda j, i: (0, j)),
            pl.BlockSpec((1, TN), lambda j, i: (0, j)),
        ],
        out_specs=pl.BlockSpec((TM, TN), lambda j, i: (i, j)),
        compiler_params=pltpu.CompilerParams(
            # No carried state: both axes independent => megacore can shard
            # either one (fixes the single-batch-tile idle-core case on v7x).
            dimension_semantics=("parallel", "parallel"),
            vmem_limit_bytes=_vmem_limit(vmem2),
        ),
        cost_estimate=pl.CostEstimate(
            flops=flops2, transcendentals=0, bytes_accessed=bytes2),
    )(h_bf, w_last, b_last)

    return out[:M, :n_last]


# --------------------------------------------------------------------------- #
# Reference / init / test helpers
# --------------------------------------------------------------------------- #
def init_decoder_params(key, p_dims):
    """Deterministic init matching nn.Linear's default U(-1/sqrt(in), 1/sqrt(in))."""
    params = []
    for inp, out in zip(p_dims[:-1], p_dims[1:]):
        key, kw, kb = jax.random.split(key, 3)
        bound = 1.0 / jnp.sqrt(jnp.float32(inp))
        # stored as (in, out) = PyTorch weight (out, in) transposed
        w = jax.random.uniform(kw, (inp, out), jnp.float32, -bound, bound)
        b = jax.random.uniform(kb, (1, out), jnp.float32, -bound, bound)
        params.append((w, b))
    return params


def decoder_reference(x, params):
    """Pure-JAX f32 reference for correctness checking."""
    h = x
    n = len(params)
    for i, (w, b) in enumerate(params):
        h = h @ w + b.reshape(1, -1)
        if i != n - 1:
            h = jnp.tanh(h)
    return h


def _bf16_roundtrip(a):
    return a.astype(jnp.bfloat16).astype(jnp.float32)


def _check(x, params, out, atol=5e-2, rtol=5e-2):
    # Compare against an f32 reference evaluated on bf16-rounded inputs so only
    # MXU/bf16 intermediate + output rounding remains as a difference.
    params_q = [(_bf16_roundtrip(w), b) for (w, b) in params]
    ref = decoder_reference(_bf16_roundtrip(x), params_q)
    out_f32 = out.astype(jnp.float32)
    assert out_f32.shape == ref.shape, (out_f32.shape, ref.shape)
    assert jnp.allclose(out_f32, ref, atol=atol, rtol=rtol), (
        float(jnp.max(jnp.abs(out_f32 - ref)))
    )


if __name__ == "__main__":
    key = jax.random.PRNGKey(0)

    # --- test 1: 3-layer stack, small tiles so both grids (multiple batch
    # tiles AND multiple N tiles) are genuinely exercised.
    p_dims = [32, 64, 48, 256]
    batch = 48
    key, kx, kp = jax.random.split(key, 3)
    x = jax.random.normal(kx, (batch, p_dims[0]), jnp.float32)
    params = init_decoder_params(kp, p_dims)
    out = jax.block_until_ready(decoder_forward(x, params, tm=16, tn=128))
    _check(x, params, out)

    # --- test 2: ragged shapes (exercises batch/N padding, output slicing,
    # single-batch-tile path and the TM1 split for the hidden stack).
    p_dims2 = [20, 50, 200]
    batch2 = 10
    key, kx2, kp2 = jax.random.split(key, 3)
    x2 = jax.random.normal(kx2, (batch2, p_dims2[0]), jnp.float32)
    params2 = init_decoder_params(kp2, p_dims2)
    out2 = jax.block_until_ready(decoder_forward(x2, params2))
    _check(x2, params2, out2)

    # --- test 3: single-layer decoder (no hidden stack; H = X path),
    # f32 output dtype option.
    p_dims3 = [24, 136]
    batch3 = 9
    key, kx3, kp3 = jax.random.split(key, 3)
    x3 = jax.random.normal(kx3, (batch3, p_dims3[0]), jnp.float32)
    params3 = init_decoder_params(kp3, p_dims3)
    out3 = jax.block_until_ready(
        decoder_forward(x3, params3, out_dtype=jnp.float32))
    _check(x3, params3, out3)

    print("KERNEL_OK")
</pallas_src>

<mosaic_0001>
module attributes {stable_mosaic.version = 11 : i64} {
  func.func @_hidden_stack_kernel(%arg0: i32, %arg1: memref<16x32xbf16, #tpu.memory_space<vmem>>, %arg2: memref<32x64xbf16, #tpu.memory_space<vmem>>, %arg3: memref<1x64xf32, #tpu.memory_space<vmem>>, %arg4: memref<64x48xbf16, #tpu.memory_space<vmem>>, %arg5: memref<1x48xf32, #tpu.memory_space<vmem>>, %arg6: memref<16x48xbf16, #tpu.memory_space<vmem>>) attributes {dimension_semantics = [#tpu.dimension_semantics<parallel>], iteration_bounds = array<i64: 3>, scalar_prefetch = 0 : i64, scratch_operands = 0 : i64, tpu.core_type = #tpu.core_type<tc>, window_params = [{transform_indices = @transform_0, window_bounds = array<i64: 16, 32>}, {pipeline_mode = #tpu.pipeline_mode<synchronous>, transform_indices = @transform_1, window_bounds = array<i64: 32, 64>}, {pipeline_mode = #tpu.pipeline_mode<synchronous>, transform_indices = @transform_2, window_bounds = array<i64: 1, 64>}, {pipeline_mode = #tpu.pipeline_mode<synchronous>, transform_indices = @transform_3, window_bounds = array<i64: 64, 48>}, {pipeline_mode = #tpu.pipeline_mode<synchronous>, transform_indices = @transform_4, window_bounds = array<i64: 1, 48>}, {transform_indices = @transform_5, window_bounds = array<i64: 16, 48>}]} {
    %c0 = arith.constant 0 : index
    %c0_0 = arith.constant 0 : index
    %0 = vector.load %arg1[%c0, %c0_0] : memref<16x32xbf16, #tpu.memory_space<vmem>>, vector<16x32xbf16>
    %c0_1 = arith.constant 0 : index
    %c0_2 = arith.constant 0 : index
    %1 = vector.load %arg2[%c0_1, %c0_2] : memref<32x64xbf16, #tpu.memory_space<vmem>>, vector<32x64xbf16>
    %cst = arith.constant dense<0.000000e+00> : vector<16x64xf32>
    %2 = tpu.matmul %0, %1, %cst {dimension_numbers = #tpu.dot_dimension_numbers<[1], [0], [0], [1], [0, 0, 1, 1], [], []>} : vector<16x32xbf16>, vector<32x64xbf16>, vector<16x64xf32> -> vector<16x64xf32>
    %c0_3 = arith.constant 0 : index
    %c0_4 = arith.constant 0 : index
    %3 = vector.load %arg3[%c0_3, %c0_4] : memref<1x64xf32, #tpu.memory_space<vmem>>, vector<1x64xf32>
    %4 = vector.broadcast %3 : vector<1x64xf32> to vector<16x64xf32>
    %5 = arith.addf %2, %4 : vector<16x64xf32>
    %6 = math.tanh %5 : vector<16x64xf32>
    %7 = arith.truncf %6 : vector<16x64xf32> to vector<16x64xbf16>
    %c0_5 = arith.constant 0 : index
    %c0_6 = arith.constant 0 : index
    %8 = vector.load %arg4[%c0_5, %c0_6] : memref<64x48xbf16, #tpu.memory_space<vmem>>, vector<64x48xbf16>
    %cst_7 = arith.constant dense<0.000000e+00> : vector<16x48xf32>
    %9 = tpu.matmul %7, %8, %cst_7 {dimension_numbers = #tpu.dot_dimension_numbers<[1], [0], [0], [1], [0, 0, 1, 1], [], []>} : vector<16x64xbf16>, vector<64x48xbf16>, vector<16x48xf32> -> vector<16x48xf32>
    %c0_8 = arith.constant 0 : index
    %c0_9 = arith.constant 0 : index
    %10 = vector.load %arg5[%c0_8, %c0_9] : memref<1x48xf32, #tpu.memory_space<vmem>>, vector<1x48xf32>
    %11 = vector.broadcast %10 : vector<1x48xf32> to vector<16x48xf32>
    %12 = arith.addf %9, %11 : vector<16x48xf32>
    %13 = math.tanh %12 : vector<16x48xf32>
    %14 = arith.truncf %13 : vector<16x48xf32> to vector<16x48xbf16>
    %c0_10 = arith.constant 0 : index
    %c0_11 = arith.constant 0 : index
    %15 = vector.load %arg6[%c0_10, %c0_11] : memref<16x48xbf16, #tpu.memory_space<vmem>>, vector<16x48xbf16>
    tpu.vector_store %arg6[%c0_10, %c0_11], %14 {strides = array<i32>} : memref<16x48xbf16, #tpu.memory_space<vmem>>, vector<16x48xbf16>,
    return
  }
  func.func @transform_0(%arg0: i32) -> (i32, i32) {
    %c0_i32 = arith.constant 0 : i32
    %c0_i32_0 = arith.constant 0 : i32
    return %arg0, %c0_i32 : i32, i32
  }
  func.func @transform_1(%arg0: i32) -> (i32, i32) {
    %c0_i32 = arith.constant 0 : i32
    %c0_i32_0 = arith.constant 0 : i32
    %c0_i32_1 = arith.constant 0 : i32
    return %c0_i32, %c0_i32_0 : i32, i32
  }
  func.func @transform_2(%arg0: i32) -> (i32, i32) {
    %c0_i32 = arith.constant 0 : i32
    %c0_i32_0 = arith.constant 0 : i32
    %c0_i32_1 = arith.constant 0 : i32
    return %c0_i32, %c0_i32_0 : i32, i32
  }
  func.func @transform_3(%arg0: i32) -> (i32, i32) {
    %c0_i32 = arith.constant 0 : i32
    %c0_i32_0 = arith.constant 0 : i32
    %c0_i32_1 = arith.constant 0 : i32
    return %c0_i32, %c0_i32_0 : i32, i32
  }
  func.func @transform_4(%arg0: i32) -> (i32, i32) {
    %c0_i32 = arith.constant 0 : i32
    %c0_i32_0 = arith.constant 0 : i32
    %c0_i32_1 = arith.constant 0 : i32
    return %c0_i32, %c0_i32_0 : i32, i32
  }
  func.func @transform_5(%arg0: i32) -> (i32, i32) {
    %c0_i32 = arith.constant 0 : i32
    %c0_i32_0 = arith.constant 0 : i32
    return %arg0, %c0_i32 : i32, i32
  }
}

</mosaic_0001>

<llo_original>
// kernel: tpu_custom_call.1
$region0: #{tpu_custom_call.1}
  #allocation0 [shape = 'u32[]', space=smem, size = 0x4, offset = 0x4, fixed_abs, tag = 'smem constant byte address 0x4 - core index']
  #allocation1 [shape = 'u32[144,128]{1,0:T(1,128)}', space=vmem, size = 0x12000, scoped, tag = 'internal scratch']
  %s0 = inlined_call_operand.vmem [shape: bf16[48,32], index: 0, kind: input, shape index: {}]
  %s1 = inlined_call_operand.vmem [shape: bf16[32,64], index: 1, kind: input, shape index: {}]
  %s2 = inlined_call_operand.vmem [shape: f32[1,64], index: 2, kind: input, shape index: {}]
  %s3 = inlined_call_operand.vmem [shape: bf16[64,48], index: 3, kind: input, shape index: {}]
  %s4 = inlined_call_operand.vmem [shape: f32[1,48], index: 4, kind: input, shape index: {}]
  %s5 = inlined_call_operand.hbm [shape: bf16[48,48], index: 5, kind: output, shape index: {}]
  %s6 = sld [smem:[#allocation0]]
  $region53: #{tpu_custom_call.1} parent=0
    _
  %s8 = ssub.s32 1, %s6
  %s9 = scalar_select 0, %s8, %s6
  $region1: #{tpu_custom_call.1} parent=0
    #allocation2 [shape = 'u8[8192]{0}', space=vmem, size = 0x2000, scoped, tag = 'output window, operand 0']
    #allocation3 [shape = 's32[2]{0}', space=sflag, size = 0x8, scoped, tag = 'scoped memory for tpu_custom_call.1']
    %10 = vsyncpa [#allocation3], 0
    %s11 = scalar_lea.sflag [#allocation3], 1
    %12 = vsyncpa %s11, 0
    loop: start=0, step=1, limit=5
    $region2: #{tpu_custom_call.1} parent=1 // loop_pre_header
      _
    $region3: #{tpu_custom_call.1} parent=1 // loop_header
      %s14 = sphi 0, %s18
      %p15 = scmp.ge.s32.totalorder %s14, 5
      %s24 = sphi 0, %s26
      %s27 = sphi 0, %s24
      %s28 = sphi 0, %s27
      %s44 = sphi 0, %s28
      %s48 = sphi 0, %s48
      %s50 = sphi 0, %s48
      %s51 = sphi 0, %s50
      %s65 = sphi 0, %s51
      %s69 = sphi 0, %s69
      %s71 = sphi 0, %s69
      %s72 = sphi 0, %s71
      %s86 = sphi 0, %s72
      %s90 = sphi 0, %s90
      %s92 = sphi 0, %s90
      %s93 = sphi 0, %s92
      %s107 = sphi 0, %s93
      %s111 = sphi 0, %s111
      %s113 = sphi 0, %s111
      %s114 = sphi 0, %s113
      %s128 = sphi 0, %s114
      %s134 = sphi 0, %s136
      %s137 = sphi 0, %s134
      %s138 = sphi 0, %s137
      %s154 = sphi 0, %s138
    $region4: #{tpu_custom_call.1} parent=1 // loop_header_branch
      %17 = sbr.rel (%p15) target = $region8
    $region5: #{tpu_custom_call.1} parent=1 // loop_body
      %s19 = ssub.s32 %s14, 1
      %s20 = ssub.s32 %s14, 2
      %s21 = sadd.s32 %s14, 1
      %s22 = ssub.s32 %s14, %s21
      %p23 = scmp.eq.s32.totalorder %s22, 0
      %s25 = sadd.s32 %s24, 1
      %s26 = scalar_select %p23, %s24, %s25
      %p29 = pneg %p23
      %p30 = scmp.eq.s32.totalorder %s14, 2
      %p31 = por %p29, %p30
      %p32 = scmp.ne.s32.totalorder %s24, %s27
      %p33 = scmp.eq.s32.totalorder %s14, 0
      %p34 = por %p32, %p33
      %p35 = scmp.ne.s32.totalorder %s24, %s27
      %p36 = scmp.eq.s32.totalorder %s19, 2
      %p37 = por %p35, %p36
      %p38 = scmp.ne.s32.totalorder %s27, %s28
      %p39 = scmp.eq.s32.totalorder %s19, 0
      %p40 = por %p38, %p39
      %p41 = scmp.ne.s32.totalorder %s27, %s28
      %p42 = scmp.eq.s32.totalorder %s20, 2
      %p43 = por %p41, %p42
      %p45 = scmp.ne.s32.totalorder %s28, %s44
      %p46 = scmp.eq.s32.totalorder %s20, 0
      %p47 = por %p45, %p46
      %s49 = sadd.s32 %s48, 1
      %p52 = scmp.eq.s32.totalorder %s14, 2
      %p53 = scmp.ne.s32.totalorder %s48, %s50
      %p54 = scmp.eq.s32.totalorder %s14, 0
      %p55 = por %p53, %p54
      %p56 = scmp.ne.s32.totalorder %s48, %s50
      %p57 = scmp.eq.s32.totalorder %s19, 2
      %p58 = por %p56, %p57
      %p59 = scmp.ne.s32.totalorder %s50, %s51
      %p60 = scmp.eq.s32.totalorder %s19, 0
      %p61 = por %p59, %p60
      %p62 = scmp.ne.s32.totalorder %s50, %s51
      %p63 = scmp.eq.s32.totalorder %s20, 2
      %p64 = por %p62, %p63
      %p66 = scmp.ne.s32.totalorder %s51, %s65
      %p67 = scmp.eq.s32.totalorder %s20, 0
      %p68 = por %p66, %p67
      %s70 = sadd.s32 %s69, 1
      %p73 = scmp.eq.s32.totalorder %s14, 2
      %p74 = scmp.ne.s32.totalorder %s69, %s71
      %p75 = scmp.eq.s32.totalorder %s14, 0
      %p76 = por %p74, %p75
      %p77 = scmp.ne.s32.totalorder %s69, %s71
      %p78 = scmp.eq.s32.totalorder %s19, 2
      %p79 = por %p77, %p78
      %p80 = scmp.ne.s32.totalorder %s71, %s72
      %p81 = scmp.eq.s32.totalorder %s19, 0
      %p82 = por %p80, %p81
      %p83 = scmp.ne.s32.totalorder %s71, %s72
      %p84 = scmp.eq.s32.totalorder %s20, 2
      %p85 = por %p83, %p84
      %p87 = scmp.ne.s32.totalorder %s72, %s86
      %p88 = scmp.eq.s32.totalorder %s20, 0
      %p89 = por %p87, %p88
      %s91 = sadd.s32 %s90, 1
      %p94 = scmp.eq.s32.totalorder %s14, 2
      %p95 = scmp.ne.s32.totalorder %s90, %s92
      %p96 = scmp.eq.s32.totalorder %s14, 0
      %p97 = por %p95, %p96
      %p98 = scmp.ne.s32.totalorder %s90, %s92
      %p99 = scmp.eq.s32.totalorder %s19, 2
      %p100 = por %p98, %p99
      %p101 = scmp.ne.s32.totalorder %s92, %s93
      %p102 = scmp.eq.s32.totalorder %s19, 0
      %p103 = por %p101, %p102
      %p104 = scmp.ne.s32.totalorder %s92, %s93
      %p105 = scmp.eq.s32.totalorder %s20, 2
      %p106 = por %p104, %p105
      %p108 = scmp.ne.s32.totalorder %s93, %s107
      %p109 = scmp.eq.s32.totalorder %s20, 0
      %p110 = por %p108, %p109
      %s112 = sadd.s32 %s111, 1
      %p115 = scmp.eq.s32.totalorder %s14, 2
      %p116 = scmp.ne.s32.totalorder %s111, %s113
      %p117 = scmp.eq.s32.totalorder %s14, 0
      %p118 = por %p116, %p117
      %p119 = scmp.ne.s32.totalorder %s111, %s113
      %p120 = scmp.eq.s32.totalorder %s19, 2
      %p121 = por %p119, %p120
      %p122 = scmp.ne.s32.totalorder %s113, %s114
      %p123 = scmp.eq.s32.totalorder %s19, 0
      %p124 = por %p122, %p123
      %p125 = scmp.ne.s32.totalorder %s113, %s114
      %p126 = scmp.eq.s32.totalorder %s20, 2
      %p127 = por %p125, %p126
      %p129 = scmp.ne.s32.totalorder %s114, %s128
      %p130 = scmp.eq.s32.totalorder %s20, 0
      %p131 = por %p129, %p130
      %s132 = ssub.s32 %s14, %s21
      %p133 = scmp.eq.s32.totalorder %s132, 0
      %s135 = sadd.s32 %s134, 1
      %s136 = scalar_select %p133, %s134, %s135
      %p139 = pneg %p133
      %p140 = scmp.eq.s32.totalorder %s14, 2
      %p141 = por %p139, %p140
      %p142 = scmp.ne.s32.totalorder %s134, %s137
      %p143 = scmp.eq.s32.totalorder %s14, 0
      %p144 = por %p142, %p143
      %p145 = scmp.ne.s32.totalorder %s134, %s137
      %p146 = scmp.eq.s32.totalorder %s19, 2
      %p147 = por %p145, %p146
      %p148 = scmp.ne.s32.totalorder %s137, %s138
      %p149 = scmp.eq.s32.totalorder %s19, 0
      %p150 = por %p148, %p149
      %p151 = scmp.ne.s32.totalorder %s137, %s138
      %p152 = scmp.eq.s32.totalorder %s20, 2
      %p153 = por %p151, %p152
      %p155 = scmp.ne.s32.totalorder %s138, %s154
      %p156 = scmp.eq.s32.totalorder %s20, 0
      %p157 = por %p155, %p156
      %p158 = scmp.le.s32.totalorder 1, %s14
      %p159 = scmp.lt.s32.totalorder %s14, 4
      %p160 = pnand %p158, %p159
      %p161 = pneg %p160
      // Predicated region
      $region9: #{tpu_custom_call.1} parent=5 // pred_check
        _
      $region10: #{tpu_custom_call.1} parent=5 // pred_check_branch
        %163 = sbr.rel (%p160) target = $region12
      $region11: #{tpu_custom_call.1} parent=5 // pred_region
        %s164 = ssub.s32 %s14, 1
        // Predicated region
        $region13: #{tpu_custom_call.1} parent=11 // pred_check
          %p165 = pneg %p61
        $region14: #{tpu_custom_call.1} parent=11 // pred_check_branch
          %167 = sbr.rel (%p165) target = $region16
        $region15: #{tpu_custom_call.1} parent=11 // pred_region
          _
        $region16: #{tpu_custom_call.1} parent=11 // pred_fallthru
          _
        // Predicated region
        $region17: #{tpu_custom_call.1} parent=11 // pred_check
          %p168 = pneg %p82
        $region18: #{tpu_custom_call.1} parent=11 // pred_check_branch
          %170 = sbr.rel (%p168) target = $region20
        $region19: #{tpu_custom_call.1} parent=11 // pred_region
          _
        $region20: #{tpu_custom_call.1} parent=11 // pred_fallthru
          _
        // Predicated region
        $region21: #{tpu_custom_call.1} parent=11 // pred_check
          %p171 = pneg %p103
        $region22: #{tpu_custom_call.1} parent=11 // pred_check_branch
          %173 = sbr.rel (%p171) target = $region24
        $region23: #{tpu_custom_call.1} parent=11 // pred_region
          _
        $region24: #{tpu_custom_call.1} parent=11 // pred_fallthru
          _
        // Predicated region
        $region25: #{tpu_custom_call.1} parent=11 // pred_check
          %p174 = pneg %p124
        $region26: #{tpu_custom_call.1} parent=11 // pred_check_branch
          %176 = sbr.rel (%p174) target = $region28
        $region27: #{tpu_custom_call.1} parent=11 // pred_region
          _
        $region28: #{tpu_custom_call.1} parent=11 // pred_fallthru
          _
      $region12: #{tpu_custom_call.1} parent=5 // pred_fallthru
        _
      %p177 = scmp.lt.s32.totalorder %s14, 3
      // Predicated region
      $region29: #{tpu_custom_call.1} parent=5 // pred_check
        %p178 = pneg %p177
      $region30: #{tpu_custom_call.1} parent=5 // pred_check_branch
        %180 = sbr.rel (%p178) target = $region32
      $region31: #{tpu_custom_call.1} parent=5 // pred_region
        // Predicated region
        $region33: #{tpu_custom_call.1} parent=31 // pred_check
          %p181 = pneg %p34
        $region34: #{tpu_custom_call.1} parent=31 // pred_check_branch
          %183 = sbr.rel (%p181) target = $region36
        $region35: #{tpu_custom_call.1} parent=31 // pred_region
          %s184 = smul.u32 2, %s14
          %p185 = scmp.lt.s32.totalorder %s184, 5
          %s186 = scalar_select %p185, %s184, 5
          %s187 = smul.addr %s186, 4
          %s188 = scalar_lea.vmem %s0, %s187
          %s189 = smul.u32 2, %s14
        $region36: #{tpu_custom_call.1} parent=31 // pred_fallthru
          _
      $region32: #{tpu_custom_call.1} parent=5 // pred_fallthru
        _
      %p190 = scmp.le.s32.totalorder 1, %s14
      %p191 = scmp.lt.s32.totalorder %s14, 4
      %p192 = pnand %p190, %p191
      %p193 = pneg %p192
      // Predicated region
      $region37: #{tpu_custom_call.1} parent=5 // pred_check
        _
      $region38: #{tpu_custom_call.1} parent=5 // pred_check_branch
        %195 = sbr.rel (%p192) target = $region40
      $region39: #{tpu_custom_call.1} parent=5 // pred_region
        %s196 = ssub.s32 %s14, 1
        %s197 = smul.u32 2, %s19
        %p198 = scmp.lt.s32.totalorder %s197, 5
        %s199 = scalar_select %p198, %s197, 5
        %s200 = smul.addr %s199, 4
        %s201 = scalar_lea.vmem %s0, %s200
        %p202 = pneg %p40
        %p203 = pneg %p37
        %p204 = pneg %p61
        %p205 = pneg %p58
        %p206 = pneg %p82
        %p207 = pneg %p79
        %p208 = pneg %p103
        %p209 = pneg %p100
        %p210 = pneg %p124
        %p211 = pneg %p121
        %p212 = pneg %p150
        %p213 = pneg %p147
        %s214 = sand.u32 %s137, 1
        %s215 = scalar_lea.sflag [#allocation3], %s214
        %s216 = sand.u32 %s137, 1
        %s217 = smul.addr %s216, 8
        %s218 = scalar_lea.vmem [#allocation2], %s217
        %s219 = smul.u32 2, %s19
        %p220 = scmp.lt.s32.totalorder %s219, 5
        %s221 = scalar_select %p220, %s219, 5
        %s222 = smul.addr %s221, 4
        %s223 = scalar_lea.vmem %s0, %s222
        %s224 = smul.u32 2, %s19
        %s225 = smul.u32 2, %s19
        %v227 = vld [vmem:[%s223] sm:$0xf]
        %v228 = vld [vmem:[%s223 + $0x4] sm:$0xf]
        %v229 = vld [vmem:[%s1] sm:$0xf]
        %v230 = vld [vmem:[%s1 + $0x4] sm:$0xf]
        %v231 = vld [vmem:[%s1 + $0x8] sm:$0xf]
        %v232 = vld [vmem:[%s1 + $0xc] sm:$0xf]
        %v233 = vld [vmem:[%s2] sm:$0x1]
        %v235 = vlaneseq
        %v236 = vshrl.u32 %v235, 7
        %v237 = vsub.s32 0, %v236
        %v238 = vrot.slane %v233, %v237
        %v242 = vunpack.c.l.b16 %v227
        %v243 = vunpack.c.l.b16 %v228
        %v244 = vpack.c.b16 %v243, %v242
        %v249 = vunpack.c.l.b16 %v229
        %v250 = vunpack.c.l.b16 %v230
        %v251 = vunpack.c.l.b16 %v231
        %v252 = vunpack.c.l.b16 %v232
        %v253 = vpack.c.b16 %v250, %v249
        %v254 = vpack.c.b16 %v252, %v251
        %vm257 = vcmask 261120
        %v259 = vsel %vm257, %v244, 0
        %261 = vmatprep.subr.bf16.mxu0 0
        %262 = vmatpush1.bf16.msra.mxu0 %v253
        %263 = vmatprep.subr.bf16.mxu0 0
        %264 = vmatpush1.bf16.msra.mxu0 %v254
        %265 = vmatprep.subr.bf16.mxu0 0
        %266 = vmatpush1.bf16.msra.mxu0 0
        %267 = vmatprep.subr.bf16.mxu0 0
        %268 = vmatpush1.bf16.msra.mxu0 0
        %269 = vmatprep.subr.bf16.mxu0 0
        %270 = vmatpush1.bf16.msra.mxu0 0
        %271 = vmatprep.subr.bf16.mxu0 0
        %272 = vmatpush1.bf16.msra.mxu0 0
        %273 = vmatprep.subr.bf16.mxu0 0
        %274 = vmatpush1.bf16.msra.mxu0 0
        %275 = vmatprep.subr.bf16.mxu0 0
        %276 = vmatpush1.bf16.msra.mxu0 0
        %277 = vmatprep.subr.bf16.mxu0 0
        %278 = vmatpush1.bf16.msra.mxu0 0
        %279 = vmatprep.subr.bf16.mxu0 0
        %280 = vmatpush1.bf16.msra.mxu0 0
        %281 = vmatprep.subr.bf16.mxu0 0
        %282 = vmatpush1.bf16.msra.mxu0 0
        %283 = vmatprep.subr.bf16.mxu0 0
        %284 = vmatpush1.bf16.msra.mxu0 0
        %285 = vmatprep.subr.bf16.mxu0 0
        %286 = vmatpush1.bf16.msra.mxu0 0
        %287 = vmatprep.subr.bf16.mxu0 0
        %288 = vmatpush1.bf16.msra.mxu0 0
        %289 = vmatprep.subr.bf16.mxu0 0
        %290 = vmatpush1.bf16.msra.mxu0 0
        %291 = vmatprep.subr.bf16.mxu0 0
        %292 = vmatpush1.bf16.msra.mxu0 0
        %293 = vmatprep.mubr.bf16.mxu0 0
        %294 = vmatmul.mubr.bf16.gmra.mrb[0].mxu0 %v259
        %v295 = vpop.f32.mrb[0].mxu0
        %v296 = vadd.f32 %v238, %v295
        %v297 = vpop.f32.mrb[0].mxu0
        %v298 = vpop.f32.mrb[0].mxu0
        %v299 = vadd.f32 %v238, %v298
        %v300 = vpop.f32.mrb[0].mxu0
        %301 = vdwg.mxu0
        %v302 = vtanh.pop %v296
        %v303 = vtanh.pop %v299
        %v304 = vpack.c.bf16 %v303, %v302
        %v305 = vld [vmem:[%s3] sm:$0xf]
        %v306 = vld [vmem:[%s3 + $0x4] sm:$0xf]
        %v307 = vld [vmem:[%s3 + $0x8] sm:$0xf]
        %v308 = vld [vmem:[%s3 + $0xc] sm:$0xf]
        %v309 = vld [vmem:[%s3 + $0x10] sm:$0xf]
        %v310 = vld [vmem:[%s3 + $0x14] sm:$0xf]
        %v311 = vld [vmem:[%s3 + $0x18] sm:$0xf]
        %v312 = vld [vmem:[%s3 + $0x1c] sm:$0xf]
        %v313 = vld [vmem:[%s4] sm:$0x1]
        %v315 = vlaneseq
        %v316 = vshrl.u32 %v315, 7
        %v317 = vsub.s32 0, %v316
        %v318 = vrot.slane %v313, %v317
        %v328 = vunpack.c.l.b16 %v305
        %v329 = vunpack.c.l.b16 %v306
        %v330 = vunpack.c.l.b16 %v307
        %v331 = vunpack.c.l.b16 %v308
        %v332 = vunpack.c.l.b16 %v309
        %v333 = vunpack.c.l.b16 %v310
        %v334 = vunpack.c.l.b16 %v311
        %v335 = vunpack.c.l.b16 %v312
        %v336 = vpack.c.b16 %v329, %v328
        %v337 = vpack.c.b16 %v331, %v330
        %v338 = vpack.c.b16 %v333, %v332
        %v339 = vpack.c.b16 %v335, %v334
        %vm344 = vcmask 523264
        %v346 = vsel %vm344, %v304, 0
        %348 = vmatprep.subr.bf16.mxu0 0
        %349 = vmatpush1.bf16.msra.mxu0 %v336
        %350 = vmatprep.subr.bf16.mxu0 0
        %351 = vmatpush1.bf16.msra.mxu0 %v337
        %352 = vmatprep.subr.bf16.mxu0 0
        %353 = vmatpush1.bf16.msra.mxu0 %v338
        %354 = vmatprep.subr.bf16.mxu0 0
        %355 = vmatpush1.bf16.msra.mxu0 %v339
        %356 = vmatprep.subr.bf16.mxu0 0
        %357 = vmatpush1.bf16.msra.mxu0 0
        %358 = vmatprep.subr.bf16.mxu0 0
        %359 = vmatpush1.bf16.msra.mxu0 0
        %360 = vmatprep.subr.bf16.mxu0 0
        %361 = vmatpush1.bf16.msra.mxu0 0
        %362 = vmatprep.subr.bf16.mxu0 0
        %363 = vmatpush1.bf16.msra.mxu0 0
        %364 = vmatprep.subr.bf16.mxu0 0
        %365 = vmatpush1.bf16.msra.mxu0 0
        %366 = vmatprep.subr.bf16.mxu0 0
        %367 = vmatpush1.bf16.msra.mxu0 0
        %368 = vmatprep.subr.bf16.mxu0 0
        %369 = vmatpush1.bf16.msra.mxu0 0
        %370 = vmatprep.subr.bf16.mxu0 0
        %371 = vmatpush1.bf16.msra.mxu0 0
        %372 = vmatprep.subr.bf16.mxu0 0
        %373 = vmatpush1.bf16.msra.mxu0 0
        %374 = vmatprep.subr.bf16.mxu0 0
        %375 = vmatpush1.bf16.msra.mxu0 0
        %376 = vmatprep.subr.bf16.mxu0 0
        %377 = vmatpush1.bf16.msra.mxu0 0
        %378 = vmatprep.subr.bf16.mxu0 0
        %379 = vmatpush1.bf16.msra.mxu0 0
        %380 = vmatprep.mubr.bf16.mxu0 0
        %381 = vmatmul.mubr.bf16.gmra.mrb[0].mxu0 %v346
        %v382 = vpop.f32.mrb[0].mxu0
        %v383 = vadd.f32 %v318, %v382
        %v384 = vpop.f32.mrb[0].mxu0
        %v385 = vpop.f32.mrb[0].mxu0
        %v386 = vadd.f32 %v318, %v385
        %v387 = vpop.f32.mrb[0].mxu0
        %388 = vdwg.mxu0
        %v389 = vtanh.pop %v383
        %v390 = vtanh.pop %v386
        %v391 = vpack.c.bf16 %v390, %v389
        %v393 = vunpack.c.l.b16 %v391
        %v394 = vunpack.c.h.b16 %v391
        %v395 = vpack.c.b16 %v393, %v393
        %v396 = vpack.c.b16 %v394, %v394
        %vm399 = vcmask 388096
        %400 = vst.msk [vmem:[%s218] sm:$0xf] %vm399, %v395
        %401 = vst.msk [vmem:[%s218 + $0x4] sm:$0xf] %vm399, %v396
        %s402 = sand.u32 %s137, 1
        %s403 = scalar_lea.sflag [#allocation3], %s402
        %s404 = sand.u32 %s137, 1
        %s405 = smul.addr %s404, 8
        %s406 = scalar_lea.vmem [#allocation2], %s405
        // Predicated region
        $region41: #{tpu_custom_call.1} parent=39 // pred_check
          %p407 = pneg %p147
        $region42: #{tpu_custom_call.1} parent=39 // pred_check_branch
          %409 = sbr.rel (%p407) target = $region44
        $region43: #{tpu_custom_call.1} parent=39 // pred_region
          %s410 = smul.u32 2, %s19
          %s412 = ssub.s32 128, 128
          %413 = vsyncadd %s403, %s412
          %s414 = smul.addr %s410, 64
          %s415 = scalar_lea.hbm %s5, %s414
          %s416 = sshll.u32 %s406, 4
          %s417 = int_to_ptr.vmem [resolvable:$true] %s416
          %422 = dma.vmem_to_hbm [thread:$0]  %s417, 128, %s415, %s403, 64, 64, 4
        $region44: #{tpu_custom_call.1} parent=39 // pred_fallthru
          _
      $region40: #{tpu_custom_call.1} parent=5 // pred_fallthru
        _
      %p423 = scmp.le.s32.totalorder 2, %s14
      // Predicated region
      $region45: #{tpu_custom_call.1} parent=5 // pred_check
        %p424 = pneg %p423
      $region46: #{tpu_custom_call.1} parent=5 // pred_check_branch
        %426 = sbr.rel (%p424) target = $region48
      $region47: #{tpu_custom_call.1} parent=5 // pred_region
        %s427 = ssub.s32 %s14, 2
        // Predicated region
        $region49: #{tpu_custom_call.1} parent=47 // pred_check
          %p428 = pneg %p153
        $region50: #{tpu_custom_call.1} parent=47 // pred_check_branch
          %430 = sbr.rel (%p428) target = $region52
        $region51: #{tpu_custom_call.1} parent=47 // pred_region
          %s431 = sand.u32 %s138, 1
          %s432 = scalar_lea.sflag [#allocation3], %s431
          %s433 = sand.u32 %s138, 1
          %s434 = smul.addr %s433, 8
          %s435 = scalar_lea.vmem [#allocation2], %s434
          %436 = dma.done %s432, 128
        $region52: #{tpu_custom_call.1} parent=47 // pred_fallthru
          _
      $region48: #{tpu_custom_call.1} parent=5 // pred_fallthru
        _
    $region6: #{tpu_custom_call.1} parent=1 // loop_footer
      %s18 = sadd.s32 1, %s14
    $region7: #{tpu_custom_call.1} parent=1 // loop_footer_branch
      %13 = sbr.rel target = $region3
    $region8: #{tpu_custom_call.1} parent=1 // loop_exit
      _
    %437 = vsyncpa [#allocation3], 1
    %s438 = scalar_lea.sflag [#allocation3], 1
    %439 = vsyncpa %s438, 1

</llo_original>
